<compile_context>
chip_gen: v6e
topology: v6e:2x2x1
jax: 0.10.0
libtpu: 0.0.40
codegen_flags: <defaults>
</compile_context>

<pallas_src>
import functools

import jax
import jax.numpy as jnp
from jax.experimental import pallas as pl
from jax.experimental.pallas import tpu as pltpu


def _round_up(n, m):
    return ((n + m - 1) // m) * m


def _vmem_limit_bytes():
    """Generation-aware scoped-VMEM request; leave ~25% headroom per core."""
    try:
        cap = int(pltpu.get_tpu_info().vmem_capacity_bytes)
    except Exception:
        cap = 64 << 20          # assume the smallest per-core VMEM (v7x)
    cap = min(cap, 128 << 20)
    return min((cap * 3) // 4, 96 << 20)


def gru_seq_kernel(x_ref, s0_ref, wx_ref, wszr_ref, whs_ref, b_ref,
                   out_ref, h_scr):
    """One (batch_tile, timestep) grid point of the fused GRU recurrence.

    Shapes (Hp = hidden padded to a multiple of 128, TB = batch tile):
      x_ref    (TB, Din)    f32   x_t for this batch tile
      s0_ref   (TB, Hp)     f32   initial hidden state
      wx_ref   (Din, 3*Hp)  bf16  x-side weights  [Wzx | Wrx | Whx]
      wszr_ref (Hp, 2*Hp)   bf16  state-side weights of z and r
      whs_ref  (Hp, Hp)     bf16  state-side weight of the hidden update
      b_ref    (1, 3*Hp)    f32   fused biases [bz | br | bh]
      out_ref  (TB, Hp)     f32   h_t
      h_scr    (TB, Hp)     f32   VMEM-resident carried state
    """
    hp = out_ref.shape[-1]
    t = pl.program_id(1)

    @pl.when(t == 0)
    def _():
        h_scr[...] = s0_ref[...]

    s = h_scr[...]
    x = x_ref[...]
    wdt = wx_ref.dtype

    # x-side contributions of all three gates + all biases: one wide MXU op.
    gx = jnp.dot(x.astype(wdt), wx_ref[...],
                 preferred_element_type=jnp.float32) + b_ref[...]
    # State-side contributions of z and r: one wide MXU op.
    gs = jnp.dot(s.astype(wdt), wszr_ref[...],
                 preferred_element_type=jnp.float32)

    # Both gate sigmoids in a single fused pass over the 2*Hp slab.
    zr = jax.nn.sigmoid(gx[:, :2 * hp] + gs)
    z = zr[:, :hp]
    r = zr[:, hp:]

    # hidden_temp = tanh(x @ Whx + (z*s) @ Whs + bh); x-part + bias already in gx.
    h_lin = gx[:, 2 * hp:] + jnp.dot((z * s).astype(wdt), whs_ref[...],
                                     preferred_element_type=jnp.float32)
    h_tmp = jnp.tanh(h_lin)

    # h = r*s + (1-r)*h_tmp  ==  h_tmp + r*(s - h_tmp)   (one fewer VALU mul)
    h = h_tmp + r * (s - h_tmp)
    h_scr[...] = h
    out_ref[...] = h


@functools.partial(jax.jit, static_argnames=("block_b", "single_buffer_weights"))
def _gru_sequence_impl(xs, state0, wx_all, ws_zr, whs, b_all, *,
                       block_b, single_buffer_weights):
    T, B, dim_in = xs.shape
    H = state0.shape[-1]
    Hp = whs.shape[-1]                       # padded hidden, multiple of 128

    Bp = _round_up(max(B, 8), 8)
    tb = min(block_b, Bp)
    Bp = _round_up(Bp, tb)

    # Pad activations ONCE for the whole sequence (not once per timestep).
    xs_p = jnp.pad(xs.astype(jnp.float32), ((0, 0), (0, Bp - B), (0, 0)))
    s0_p = jnp.pad(state0.astype(jnp.float32), ((0, Bp - B), (0, Hp - H)))

    # Constant-index weight blocks stay VMEM-resident for the full sequence;
    # request single buffering to halve their footprint when supported.
    wkw = {"pipeline_mode": pl.Buffered(1)} if single_buffer_weights else {}

    grid = (Bp // tb, T)

    out = pl.pallas_call(
        gru_seq_kernel,
        out_shape=jax.ShapeDtypeStruct((T, Bp, Hp), jnp.float32),
        grid_spec=pltpu.PrefetchScalarGridSpec(
            num_scalar_prefetch=0,
            grid=grid,
            in_specs=[
                pl.BlockSpec((None, tb, dim_in), lambda b, t: (t, b, 0)),    # x_t
                pl.BlockSpec((tb, Hp), lambda b, t: (b, 0)),                 # state0
                pl.BlockSpec((dim_in, 3 * Hp), lambda b, t: (0, 0), **wkw),  # Wx_all
                pl.BlockSpec((Hp, 2 * Hp), lambda b, t: (0, 0), **wkw),      # Ws_zr
                pl.BlockSpec((Hp, Hp), lambda b, t: (0, 0), **wkw),          # Whs
                pl.BlockSpec((1, 3 * Hp), lambda b, t: (0, 0), **wkw),       # biases
            ],
            out_specs=pl.BlockSpec((None, tb, Hp), lambda b, t: (t, b, 0)),  # h_t
            scratch_shapes=[pltpu.VMEM((tb, Hp), jnp.float32)],              # carry
        ),
        compiler_params=pltpu.CompilerParams(
            dimension_semantics=("parallel", "arbitrary"),
            vmem_limit_bytes=_vmem_limit_bytes(),
        ),
    )(xs_p, s0_p, wx_all, ws_zr, whs, b_all)

    return out[:, :B, :H]


def gru_sequence(xs, state0, packed, *, block_b=256):
    """Run the GRUCell over a whole sequence in one fused kernel.

    xs: (T, B, dim_in) f32, state0: (B, H) f32 -> hidden states (T, B, H) f32.
    Packed weights are DMA'd to VMEM once and reused for all T steps.
    """
    try:
        return _gru_sequence_impl(xs, state0, *packed, block_b=block_b,
                                  single_buffer_weights=True)
    except Exception:
        # TODO(synk): this JAX build rejected pipeline_mode=pl.Buffered(1);
        #             fall back to default double-buffered weight blocks.
        return _gru_sequence_impl(xs, state0, *packed, block_b=block_b,
                                  single_buffer_weights=False)


def gru_cell(x, state, packed, *, block_b=256):
    """Single GRUCell step (exactly the PyTorch module forward).

    x: (B, dim_in) f32, state: (B, H) f32 -> (B, H) f32.
    """
    return gru_sequence(x[None], state, packed, block_b=block_b)[0]


def make_raw_params(key, dim_in, dim_out):
    """Raw parameters mirroring the nn.Linear layout of the PyTorch module."""
    H = dim_out
    k1, k2, k3, k4 = jax.random.split(key, 4)
    w_zr = jax.random.normal(k1, (2 * H, dim_in + H), jnp.float32) * 0.1
    b_zr = jax.random.normal(k2, (2 * H,), jnp.float32) * 0.1
    w_h = jax.random.normal(k3, (H, dim_in + H), jnp.float32) * 0.1
    b_h = jax.random.normal(k4, (H,), jnp.float32) * 0.1
    return w_zr, b_zr, w_h, b_h


def pack_params(raw, dim_in, hidden, weight_dtype=jnp.bfloat16):
    """Pack/pad the raw Linear weights into the fused, lane-dense kernel layout.

    Returns:
      wx_all: (dim_in, 3*Hp) weight_dtype  columns [z | r | h] of x-side weights
      ws_zr:  (Hp, 2*Hp)     weight_dtype  columns [z | r] of state-side weights
      whs:    (Hp, Hp)       weight_dtype  state-side weight of the hidden update
      b_all:  (1, 3*Hp)      f32           fused biases [bz | br | bh]
    """
    w_zr, b_zr, w_h, b_h = raw
    H = hidden
    Hp = _round_up(H, 128)

    # torch.split(z_r, H, dim=-1) -> z = rows [0:H), r = rows [H:2H) of W.
    wz, wr = w_zr[:H], w_zr[H:]
    bz, br = b_zr[:H], b_zr[H:]

    def pad_cols(w):                       # (dim_in, H) -> (dim_in, Hp)
        return jnp.pad(w, ((0, 0), (0, Hp - H)))

    def pad_both(w):                       # (H, H) -> (Hp, Hp)
        return jnp.pad(w, ((0, Hp - H), (0, Hp - H)))

    def pad_bias(b):                       # (H,) -> (Hp,)
        return jnp.pad(b, (0, Hp - H))

    # Linear computes x @ W.T + b; split the in-axis into x-part / state-part.
    wx_all = jnp.concatenate(
        [pad_cols(wz[:, :dim_in].T),
         pad_cols(wr[:, :dim_in].T),
         pad_cols(w_h[:, :dim_in].T)], axis=1).astype(weight_dtype)
    ws_zr = jnp.concatenate(
        [pad_both(wz[:, dim_in:].T),
         pad_both(wr[:, dim_in:].T)], axis=1).astype(weight_dtype)
    whs = pad_both(w_h[:, dim_in:].T).astype(weight_dtype)
    b_all = jnp.concatenate(
        [pad_bias(bz), pad_bias(br), pad_bias(b_h)]).reshape(1, 3 * Hp)
    b_all = b_all.astype(jnp.float32)

    return wx_all, ws_zr, whs, b_all


def gru_cell_reference(x, state, raw):
    """Pure-JAX f32 reference matching the PyTorch forward exactly."""
    w_zr, b_zr, w_h, b_h = raw
    H = state.shape[-1]
    xs = jnp.concatenate([x, state], axis=-1)
    z_r = jax.nn.sigmoid(xs @ w_zr.T + b_zr)
    z, r = z_r[:, :H], z_r[:, H:]
    h_tmp = jnp.tanh(jnp.concatenate([x, z * state], axis=-1) @ w_h.T + b_h)
    return r * state + (1.0 - r) * h_tmp


def gru_sequence_reference(xs, state0, raw):
    def step(s, x):
        h = gru_cell_reference(x, s, raw)
        return h, h
    _, hs = jax.lax.scan(step, state0, xs)
    return hs


if __name__ == "__main__":
    B, dim_in, dim_out, T = 8, 16, 32, 8

    key = jax.random.PRNGKey(0)
    kx, ks, kp = jax.random.split(key, 3)

    xs = jax.random.normal(kx, (T, B, dim_in), jnp.float32)
    state0 = jax.random.normal(ks, (B, dim_out), jnp.float32)

    raw = make_raw_params(kp, dim_in, dim_out)
    packed = pack_params(raw, dim_in, dim_out)

    # Single step: exactly the PyTorch module forward.
    out_step = jax.block_until_ready(gru_cell(xs[0], state0, packed))
    ref_step = gru_cell_reference(xs[0], state0, raw)
    assert out_step.shape == (B, dim_out)
    # bf16 weights -> loosen tolerance vs. the f32 reference.
    assert jnp.allclose(out_step, ref_step, atol=2e-2, rtol=5e-2), (
        float(jnp.max(jnp.abs(out_step - ref_step))))

    # Full recurrence fused in one kernel (weights DMA'd once for all T steps).
    out_seq = jax.block_until_ready(gru_sequence(xs, state0, packed))
    ref_seq = gru_sequence_reference(xs, state0, raw)
    assert out_seq.shape == (T, B, dim_out)
    assert jnp.allclose(out_seq, ref_seq, atol=2e-2, rtol=5e-2), (
        float(jnp.max(jnp.abs(out_seq - ref_seq))))

    print("KERNEL_OK")
</pallas_src>

<mosaic_0001>
module attributes {stable_mosaic.version = 11 : i64} {
  func.func @gru_seq_kernel(%arg0: i32, %arg1: i32, %arg2: memref<1x8x16xf32, #tpu.memory_space<vmem>>, %arg3: memref<8x128xf32, #tpu.memory_space<vmem>>, %arg4: memref<16x384xbf16, #tpu.memory_space<vmem>>, %arg5: memref<128x256xbf16, #tpu.memory_space<vmem>>, %arg6: memref<128x128xbf16, #tpu.memory_space<vmem>>, %arg7: memref<1x384xf32, #tpu.memory_space<vmem>>, %arg8: memref<1x8x128xf32, #tpu.memory_space<vmem>>, %arg9: memref<8x128xf32, #tpu.memory_space<vmem>>) attributes {dimension_semantics = [#tpu.dimension_semantics<parallel>, #tpu.dimension_semantics<arbitrary>], iteration_bounds = array<i64: 1, 1>, scalar_prefetch = 0 : i64, scratch_operands = 1 : i64, tpu.core_type = #tpu.core_type<tc>, window_params = [{transform_indices = @transform_0, window_bounds = array<i64: 1, 8, 16>}, {transform_indices = @transform_1, window_bounds = array<i64: 8, 128>}, {pipeline_mode = #tpu.pipeline_mode<synchronous>, transform_indices = @transform_2, window_bounds = array<i64: 16, 384>}, {pipeline_mode = #tpu.pipeline_mode<synchronous>, transform_indices = @transform_3, window_bounds = array<i64: 128, 256>}, {pipeline_mode = #tpu.pipeline_mode<synchronous>, transform_indices = @transform_4, window_bounds = array<i64: 128, 128>}, {pipeline_mode = #tpu.pipeline_mode<synchronous>, transform_indices = @transform_5, window_bounds = array<i64: 1, 384>}, {transform_indices = @transform_6, window_bounds = array<i64: 1, 8, 128>}]} {
    %c0_i32 = arith.constant 0 : i32
    %0 = arith.cmpi eq, %arg1, %c0_i32 : i32
    %1 = arith.extui %0 : i1 to i32
    %c0_i32_0 = arith.constant 0 : i32
    %2 = arith.cmpi ne, %1, %c0_i32_0 : i32
    scf.if %2 {
      %c0_21 = arith.constant 0 : index
      %c0_22 = arith.constant 0 : index
      %38 = vector.load %arg3[%c0_21, %c0_22] : memref<8x128xf32, #tpu.memory_space<vmem>>, vector<8x128xf32>
      %c0_23 = arith.constant 0 : index
      %c0_24 = arith.constant 0 : index
      %39 = vector.load %arg9[%c0_23, %c0_24] : memref<8x128xf32, #tpu.memory_space<vmem>>, vector<8x128xf32>
      tpu.vector_store %arg9[%c0_23, %c0_24], %38 {strides = array<i32>} : memref<8x128xf32, #tpu.memory_space<vmem>>, vector<8x128xf32>,
    } else {
    }
    %c0 = arith.constant 0 : index
    %c0_1 = arith.constant 0 : index
    %3 = vector.load %arg9[%c0, %c0_1] : memref<8x128xf32, #tpu.memory_space<vmem>>, vector<8x128xf32>
    %c0_2 = arith.constant 0 : index
    %c0_3 = arith.constant 0 : index
    %c0_4 = arith.constant 0 : index
    %4 = vector.load %arg2[%c0_2, %c0_3, %c0_4] : memref<1x8x16xf32, #tpu.memory_space<vmem>>, vector<1x8x16xf32>
    %5 = vector.shape_cast %4 : vector<1x8x16xf32> to vector<8x16xf32>
    %6 = arith.truncf %5 : vector<8x16xf32> to vector<8x16xbf16>
    %c0_5 = arith.constant 0 : index
    %c0_6 = arith.constant 0 : index
    %7 = vector.load %arg4[%c0_5, %c0_6] : memref<16x384xbf16, #tpu.memory_space<vmem>>, vector<16x384xbf16>
    %cst = arith.constant dense<0.000000e+00> : vector<8x384xf32>
    %8 = tpu.matmul %6, %7, %cst {dimension_numbers = #tpu.dot_dimension_numbers<[1], [0], [0], [1], [0, 0, 1, 1], [], []>} : vector<8x16xbf16>, vector<16x384xbf16>, vector<8x384xf32> -> vector<8x384xf32>
    %c0_7 = arith.constant 0 : index
    %c0_8 = arith.constant 0 : index
    %9 = vector.load %arg7[%c0_7, %c0_8] : memref<1x384xf32, #tpu.memory_space<vmem>>, vector<1x384xf32>
    %10 = vector.broadcast %9 : vector<1x384xf32> to vector<8x384xf32>
    %11 = arith.addf %8, %10 : vector<8x384xf32>
    %12 = arith.truncf %3 : vector<8x128xf32> to vector<8x128xbf16>
    %c0_9 = arith.constant 0 : index
    %c0_10 = arith.constant 0 : index
    %13 = vector.load %arg5[%c0_9, %c0_10] : memref<128x256xbf16, #tpu.memory_space<vmem>>, vector<128x256xbf16>
    %cst_11 = arith.constant dense<0.000000e+00> : vector<8x256xf32>
    %14 = tpu.matmul %12, %13, %cst_11 {dimension_numbers = #tpu.dot_dimension_numbers<[1], [0], [0], [1], [0, 0, 1, 1], [], []>} : vector<8x128xbf16>, vector<128x256xbf16>, vector<8x256xf32> -> vector<8x256xf32>
    %15 = vector.extract_strided_slice %11 {offsets = [0, 0], sizes = [8, 256], strides = [1, 1]} : vector<8x384xf32> to vector<8x256xf32>
    %16 = arith.addf %15, %14 : vector<8x256xf32>
    %17 = arith.negf %16 : vector<8x256xf32>
    %18 = math.exp %17 : vector<8x256xf32>
    %cst_12 = arith.constant 1.000000e+00 : f32
    %19 = vector.broadcast %cst_12 : f32 to vector<8x256xf32>
    %20 = arith.addf %19, %18 : vector<8x256xf32>
    %21 = arith.divf %19, %20 : vector<8x256xf32>
    %22 = vector.extract_strided_slice %21 {offsets = [0, 0], sizes = [8, 128], strides = [1, 1]} : vector<8x256xf32> to vector<8x128xf32>
    %23 = vector.extract_strided_slice %21 {offsets = [0, 128], sizes = [8, 128], strides = [1, 1]} : vector<8x256xf32> to vector<8x128xf32>
    %24 = vector.extract_strided_slice %11 {offsets = [0, 256], sizes = [8, 128], strides = [1, 1]} : vector<8x384xf32> to vector<8x128xf32>
    %25 = arith.mulf %22, %3 : vector<8x128xf32>
    %26 = arith.truncf %25 : vector<8x128xf32> to vector<8x128xbf16>
    %c0_13 = arith.constant 0 : index
    %c0_14 = arith.constant 0 : index
    %27 = vector.load %arg6[%c0_13, %c0_14] : memref<128x128xbf16, #tpu.memory_space<vmem>>, vector<128x128xbf16>
    %cst_15 = arith.constant dense<0.000000e+00> : vector<8x128xf32>
    %28 = tpu.matmul %26, %27, %cst_15 {dimension_numbers = #tpu.dot_dimension_numbers<[1], [0], [0], [1], [0, 0, 1, 1], [], []>} : vector<8x128xbf16>, vector<128x128xbf16>, vector<8x128xf32> -> vector<8x128xf32>
    %29 = arith.addf %24, %28 : vector<8x128xf32>
    %30 = math.tanh %29 : vector<8x128xf32>
    %31 = arith.subf %3, %30 : vector<8x128xf32>
    %32 = arith.mulf %23, %31 : vector<8x128xf32>
    %33 = arith.addf %30, %32 : vector<8x128xf32>
    %c0_16 = arith.constant 0 : index
    %c0_17 = arith.constant 0 : index
    %34 = vector.load %arg9[%c0_16, %c0_17] : memref<8x128xf32, #tpu.memory_space<vmem>>, vector<8x128xf32>
    tpu.vector_store %arg9[%c0_16, %c0_17], %33 {strides = array<i32>} : memref<8x128xf32, #tpu.memory_space<vmem>>, vector<8x128xf32>,
    %c0_18 = arith.constant 0 : index
    %c0_19 = arith.constant 0 : index
    %c0_20 = arith.constant 0 : index
    %35 = vector.load %arg8[%c0_18, %c0_19, %c0_20] : memref<1x8x128xf32, #tpu.memory_space<vmem>>, vector<1x8x128xf32>
    %36 = vector.shape_cast %35 : vector<1x8x128xf32> to vector<8x128xf32>
    %37 = vector.shape_cast %33 : vector<8x128xf32> to vector<1x8x128xf32>
    tpu.vector_store %arg8[%c0_18, %c0_19, %c0_20], %37 {strides = array<i32>} : memref<1x8x128xf32, #tpu.memory_space<vmem>>, vector<1x8x128xf32>,
    return
  }
  func.func @transform_0(%arg0: i32, %arg1: i32) -> (i32, i32, i32) {
    %c0_i32 = arith.constant 0 : i32
    %c0_i32_0 = arith.constant 0 : i32
    return %arg1, %arg0, %c0_i32 : i32, i32, i32
  }
  func.func @transform_1(%arg0: i32, %arg1: i32) -> (i32, i32) {
    %c0_i32 = arith.constant 0 : i32
    %c0_i32_0 = arith.constant 0 : i32
    return %arg0, %c0_i32 : i32, i32
  }
  func.func @transform_2(%arg0: i32, %arg1: i32) -> (i32, i32) {
    %c0_i32 = arith.constant 0 : i32
    %c0_i32_0 = arith.constant 0 : i32
    %c0_i32_1 = arith.constant 0 : i32
    return %c0_i32, %c0_i32_0 : i32, i32
  }
  func.func @transform_3(%arg0: i32, %arg1: i32) -> (i32, i32) {
    %c0_i32 = arith.constant 0 : i32
    %c0_i32_0 = arith.constant 0 : i32
    %c0_i32_1 = arith.constant 0 : i32
    return %c0_i32, %c0_i32_0 : i32, i32
  }
  func.func @transform_4(%arg0: i32, %arg1: i32) -> (i32, i32) {
    %c0_i32 = arith.constant 0 : i32
    %c0_i32_0 = arith.constant 0 : i32
    %c0_i32_1 = arith.constant 0 : i32
    return %c0_i32, %c0_i32_0 : i32, i32
  }
  func.func @transform_5(%arg0: i32, %arg1: i32) -> (i32, i32) {
    %c0_i32 = arith.constant 0 : i32
    %c0_i32_0 = arith.constant 0 : i32
    %c0_i32_1 = arith.constant 0 : i32
    return %c0_i32, %c0_i32_0 : i32, i32
  }
  func.func @transform_6(%arg0: i32, %arg1: i32) -> (i32, i32, i32) {
    %c0_i32 = arith.constant 0 : i32
    %c0_i32_0 = arith.constant 0 : i32
    return %arg1, %arg0, %c0_i32 : i32, i32, i32
  }
}

module attributes {stable_mosaic.version = 11 : i64} {
  func.func @gru_seq_kernel(%arg0: i32, %arg1: i32, %arg2: memref<1x8x16xf32, #tpu.memory_space<vmem>>, %arg3: memref<8x128xf32, #tpu.memory_space<vmem>>, %arg4: memref<16x384xbf16, #tpu.memory_space<vmem>>, %arg5: memref<128x256xbf16, #tpu.memory_space<vmem>>, %arg6: memref<128x128xbf16, #tpu.memory_space<vmem>>, %arg7: memref<1x384xf32, #tpu.memory_space<vmem>>, %arg8: memref<1x8x128xf32, #tpu.memory_space<vmem>>, %arg9: memref<8x128xf32, #tpu.memory_space<vmem>>) attributes {dimension_semantics = [#tpu.dimension_semantics<parallel>, #tpu.dimension_semantics<arbitrary>], iteration_bounds = array<i64: 1, 1>, scalar_prefetch = 0 : i64, scratch_operands = 1 : i64, tpu.core_type = #tpu.core_type<tc>, window_params = [{transform_indices = @transform_0, window_bounds = array<i64: 1, 8, 16>}, {transform_indices = @transform_1, window_bounds = array<i64: 8, 128>}, {pipeline_mode = #tpu.pipeline_mode<synchronous>, transform_indices = @transform_2, window_bounds = array<i64: 16, 384>}, {pipeline_mode = #tpu.pipeline_mode<synchronous>, transform_indices = @transform_3, window_bounds = array<i64: 128, 256>}, {pipeline_mode = #tpu.pipeline_mode<synchronous>, transform_indices = @transform_4, window_bounds = array<i64: 128, 128>}, {pipeline_mode = #tpu.pipeline_mode<synchronous>, transform_indices = @transform_5, window_bounds = array<i64: 1, 384>}, {transform_indices = @transform_6, window_bounds = array<i64: 1, 8, 128>}]} {
    %c0_i32 = arith.constant 0 : i32
    %0 = arith.cmpi eq, %arg1, %c0_i32 : i32
    %1 = arith.extui %0 : i1 to i32
    %c0_i32_0 = arith.constant 0 : i32
    %2 = arith.cmpi ne, %1, %c0_i32_0 : i32
    scf.if %2 {
      %c0_21 = arith.constant 0 : index
      %c0_22 = arith.constant 0 : index
      %38 = vector.load %arg3[%c0_21, %c0_22] : memref<8x128xf32, #tpu.memory_space<vmem>>, vector<8x128xf32>
      %c0_23 = arith.constant 0 : index
      %c0_24 = arith.constant 0 : index
      %39 = vector.load %arg9[%c0_23, %c0_24] : memref<8x128xf32, #tpu.memory_space<vmem>>, vector<8x128xf32>
      tpu.vector_store %arg9[%c0_23, %c0_24], %38 {strides = array<i32>} : memref<8x128xf32, #tpu.memory_space<vmem>>, vector<8x128xf32>,
    } else {
    }
    %c0 = arith.constant 0 : index
    %c0_1 = arith.constant 0 : index
    %3 = vector.load %arg9[%c0, %c0_1] : memref<8x128xf32, #tpu.memory_space<vmem>>, vector<8x128xf32>
    %c0_2 = arith.constant 0 : index
    %c0_3 = arith.constant 0 : index
    %c0_4 = arith.constant 0 : index
    %4 = vector.load %arg2[%c0_2, %c0_3, %c0_4] : memref<1x8x16xf32, #tpu.memory_space<vmem>>, vector<1x8x16xf32>
    %5 = vector.shape_cast %4 : vector<1x8x16xf32> to vector<8x16xf32>
    %6 = arith.truncf %5 : vector<8x16xf32> to vector<8x16xbf16>
    %c0_5 = arith.constant 0 : index
    %c0_6 = arith.constant 0 : index
    %7 = vector.load %arg4[%c0_5, %c0_6] : memref<16x384xbf16, #tpu.memory_space<vmem>>, vector<16x384xbf16>
    %cst = arith.constant dense<0.000000e+00> : vector<8x384xf32>
    %8 = tpu.matmul %6, %7, %cst {dimension_numbers = #tpu.dot_dimension_numbers<[1], [0], [0], [1], [0, 0, 1, 1], [], []>} : vector<8x16xbf16>, vector<16x384xbf16>, vector<8x384xf32> -> vector<8x384xf32>
    %c0_7 = arith.constant 0 : index
    %c0_8 = arith.constant 0 : index
    %9 = vector.load %arg7[%c0_7, %c0_8] : memref<1x384xf32, #tpu.memory_space<vmem>>, vector<1x384xf32>
    %10 = vector.broadcast %9 : vector<1x384xf32> to vector<8x384xf32>
    %11 = arith.addf %8, %10 : vector<8x384xf32>
    %12 = arith.truncf %3 : vector<8x128xf32> to vector<8x128xbf16>
    %c0_9 = arith.constant 0 : index
    %c0_10 = arith.constant 0 : index
    %13 = vector.load %arg5[%c0_9, %c0_10] : memref<128x256xbf16, #tpu.memory_space<vmem>>, vector<128x256xbf16>
    %cst_11 = arith.constant dense<0.000000e+00> : vector<8x256xf32>
    %14 = tpu.matmul %12, %13, %cst_11 {dimension_numbers = #tpu.dot_dimension_numbers<[1], [0], [0], [1], [0, 0, 1, 1], [], []>} : vector<8x128xbf16>, vector<128x256xbf16>, vector<8x256xf32> -> vector<8x256xf32>
    %15 = vector.extract_strided_slice %11 {offsets = [0, 0], sizes = [8, 256], strides = [1, 1]} : vector<8x384xf32> to vector<8x256xf32>
    %16 = arith.addf %15, %14 : vector<8x256xf32>
    %17 = arith.negf %16 : vector<8x256xf32>
    %18 = math.exp %17 : vector<8x256xf32>
    %cst_12 = arith.constant 1.000000e+00 : f32
    %19 = vector.broadcast %cst_12 : f32 to vector<8x256xf32>
    %20 = arith.addf %19, %18 : vector<8x256xf32>
    %21 = arith.divf %19, %20 : vector<8x256xf32>
    %22 = vector.extract_strided_slice %21 {offsets = [0, 0], sizes = [8, 128], strides = [1, 1]} : vector<8x256xf32> to vector<8x128xf32>
    %23 = vector.extract_strided_slice %21 {offsets = [0, 128], sizes = [8, 128], strides = [1, 1]} : vector<8x256xf32> to vector<8x128xf32>
    %24 = vector.extract_strided_slice %11 {offsets = [0, 256], sizes = [8, 128], strides = [1, 1]} : vector<8x384xf32> to vector<8x128xf32>
    %25 = arith.mulf %22, %3 : vector<8x128xf32>
    %26 = arith.truncf %25 : vector<8x128xf32> to vector<8x128xbf16>
    %c0_13 = arith.constant 0 : index
    %c0_14 = arith.constant 0 : index
    %27 = vector.load %arg6[%c0_13, %c0_14] : memref<128x128xbf16, #tpu.memory_space<vmem>>, vector<128x128xbf16>
    %cst_15 = arith.constant dense<0.000000e+00> : vector<8x128xf32>
    %28 = tpu.matmul %26, %27, %cst_15 {dimension_numbers = #tpu.dot_dimension_numbers<[1], [0], [0], [1], [0, 0, 1, 1], [], []>} : vector<8x128xbf16>, vector<128x128xbf16>, vector<8x128xf32> -> vector<8x128xf32>
    %29 = arith.addf %24, %28 : vector<8x128xf32>
    %30 = math.tanh %29 : vector<8x128xf32>
    %31 = arith.subf %3, %30 : vector<8x128xf32>
    %32 = arith.mulf %23, %31 : vector<8x128xf32>
    %33 = arith.addf %30, %32 : vector<8x128xf32>
    %c0_16 = arith.constant 0 : index
    %c0_17 = arith.constant 0 : index
    %34 = vector.load %arg9[%c0_16, %c0_17] : memref<8x128xf32, #tpu.memory_space<vmem>>, vector<8x128xf32>
    tpu.vector_store %arg9[%c0_16, %c0_17], %33 {strides = array<i32>} : memref<8x128xf32, #tpu.memory_space<vmem>>, vector<8x128xf32>,
    %c0_18 = arith.constant 0 : index
    %c0_19 = arith.constant 0 : index
    %c0_20 = arith.constant 0 : index
    %35 = vector.load %arg8[%c0_18, %c0_19, %c0_20] : memref<1x8x128xf32, #tpu.memory_space<vmem>>, vector<1x8x128xf32>
    %36 = vector.shape_cast %35 : vector<1x8x128xf32> to vector<8x128xf32>
    %37 = vector.shape_cast %33 : vector<8x128xf32> to vector<1x8x128xf32>
    tpu.vector_store %arg8[%c0_18, %c0_19, %c0_20], %37 {strides = array<i32>} : memref<1x8x128xf32, #tpu.memory_space<vmem>>, vector<1x8x128xf32>,
    return
  }
  func.func @transform_0(%arg0: i32, %arg1: i32) -> (i32, i32, i32) {
    %c0_i32 = arith.constant 0 : i32
    %c0_i32_0 = arith.constant 0 : i32
    return %arg1, %arg0, %c0_i32 : i32, i32, i32
  }
  func.func @transform_1(%arg0: i32, %arg1: i32) -> (i32, i32) {
    %c0_i32 = arith.constant 0 : i32
    %c0_i32_0 = arith.constant 0 : i32
    return %arg0, %c0_i32 : i32, i32
  }
  func.func @transform_2(%arg0: i32, %arg1: i32) -> (i32, i32) {
    %c0_i32 = arith.constant 0 : i32
    %c0_i32_0 = arith.constant 0 : i32
    %c0_i32_1 = arith.constant 0 : i32
    return %c0_i32, %c0_i32_0 : i32, i32
  }
  func.func @transform_3(%arg0: i32, %arg1: i32) -> (i32, i32) {
    %c0_i32 = arith.constant 0 : i32
    %c0_i32_0 = arith.constant 0 : i32
    %c0_i32_1 = arith.constant 0 : i32
    return %c0_i32, %c0_i32_0 : i32, i32
  }
  func.func @transform_4(%arg0: i32, %arg1: i32) -> (i32, i32) {
    %c0_i32 = arith.constant 0 : i32
    %c0_i32_0 = arith.constant 0 : i32
    %c0_i32_1 = arith.constant 0 : i32
    return %c0_i32, %c0_i32_0 : i32, i32
  }
  func.func @transform_5(%arg0: i32, %arg1: i32) -> (i32, i32) {
    %c0_i32 = arith.constant 0 : i32
    %c0_i32_0 = arith.constant 0 : i32
    %c0_i32_1 = arith.constant 0 : i32
    return %c0_i32, %c0_i32_0 : i32, i32
  }
  func.func @transform_6(%arg0: i32, %arg1: i32) -> (i32, i32, i32) {
    %c0_i32 = arith.constant 0 : i32
    %c0_i32_0 = arith.constant 0 : i32
    return %arg1, %arg0, %c0_i32 : i32, i32, i32
  }
}

</mosaic_0001>

<llo_original>
// kernel: _gru_sequence_impl.1
$region0: #{_gru_sequence_impl.1}
  #allocation0 [shape = 'u32[]', space=smem, size = 0x4, offset = 0x4, fixed_abs, tag = 'smem constant byte address 0x4 - core index']
  #allocation1 [shape = 'u32[144,128]{1,0:T(1,128)}', space=vmem, size = 0x12000, scoped, tag = 'internal scratch']
  #allocation2 [shape = 'f32[8,128]{1,0:T(8,128)}', space=vmem, size = 0x1000, scoped, tag = 'scratch operand']
  %s0 = inlined_call_operand.vmem [shape: f32[1,8,16], index: 0, kind: input, shape index: {}]
  %s1 = inlined_call_operand.vmem [shape: f32[8,128], index: 1, kind: input, shape index: {}]
  %s2 = inlined_call_operand.hbm [shape: bf16[16,384], index: 2, kind: input, shape index: {}]
  %s3 = inlined_call_operand.hbm [shape: bf16[128,256], index: 3, kind: input, shape index: {}]
  %s4 = inlined_call_operand.hbm [shape: bf16[128,128], index: 4, kind: input, shape index: {}]
  %s5 = inlined_call_operand.vmem [shape: f32[1,384], index: 5, kind: input, shape index: {}]
  %s6 = inlined_call_operand.hbm [shape: f32[1,8,128], index: 6, kind: output, shape index: {}]
  %s7 = sld [smem:[#allocation0]]
  $region50: #{_gru_sequence_impl.1} parent=0
    _
  %s9 = ssub.s32 1, %s7
  %s10 = scalar_select 0, %s9, %s7
  $region1: #{_gru_sequence_impl.1} parent=0
    #allocation3 [shape = 'u8[12288]{0}', space=vmem, size = 0x3000, scoped, tag = 'input window, operand 2, single buffered']
    #allocation4 [shape = 's32[1]{0}', space=sflag, size = 0x4, scoped, tag = 'scoped memory for _gru_sequence_impl.1']
    #allocation5 [shape = 's32[1]{0}', space=sflag, size = 0x4, scoped, tag = 'scoped memory for _gru_sequence_impl.1']
    #allocation6 [shape = 'u8[65536]{0}', space=vmem, size = 0x10000, scoped, tag = 'input window, operand 3, single buffered']
    #allocation7 [shape = 's32[1]{0}', space=sflag, size = 0x4, scoped, tag = 'scoped memory for _gru_sequence_impl.1']
    #allocation8 [shape = 'u8[32768]{0}', space=vmem, size = 0x8000, scoped, tag = 'input window, operand 4, single buffered']
    #allocation9 [shape = 'u8[4096]{0}', space=vmem, size = 0x1000, scoped, tag = 'output window, operand 0, single buffered']
    %11 = vsyncpa [#allocation4], 0
    %12 = vsyncpa [#allocation7], 0
    %13 = vsyncpa [#allocation5], 0
    // Predicated region
    $region2: #{_gru_sequence_impl.1} parent=1 // pred_check
      _
    $region3: #{_gru_sequence_impl.1} parent=1 // pred_check_branch
      %15 = sbr.rel (0) target = $region5
    $region4: #{_gru_sequence_impl.1} parent=1 // pred_region
      _
    $region5: #{_gru_sequence_impl.1} parent=1 // pred_fallthru
      _
    // Predicated region
    $region6: #{_gru_sequence_impl.1} parent=1 // pred_check
      _
    $region7: #{_gru_sequence_impl.1} parent=1 // pred_check_branch
      %17 = sbr.rel (0) target = $region9
    $region8: #{_gru_sequence_impl.1} parent=1 // pred_region
      _
    $region9: #{_gru_sequence_impl.1} parent=1 // pred_fallthru
      _
    // Predicated region
    $region10: #{_gru_sequence_impl.1} parent=1 // pred_check
      _
    $region11: #{_gru_sequence_impl.1} parent=1 // pred_check_branch
      %19 = sbr.rel (0) target = $region13
    $region12: #{_gru_sequence_impl.1} parent=1 // pred_region
      %s21 = ssub.s32 384, 384
      %22 = vsyncadd [#allocation4], %s21
      %s23 = sshll.u32 [#allocation3], 4
      %s24 = int_to_ptr.vmem [resolvable:$true] %s23
      %29 = dma.hbm_to_vmem [thread:$0]  %s2, 384, %s24, [#allocation4], 192, 192, 12
    $region13: #{_gru_sequence_impl.1} parent=1 // pred_fallthru
      _
    // Predicated region
    $region14: #{_gru_sequence_impl.1} parent=1 // pred_check
      _
    $region15: #{_gru_sequence_impl.1} parent=1 // pred_check_branch
      %31 = sbr.rel (0) target = $region17
    $region16: #{_gru_sequence_impl.1} parent=1 // pred_region
      %s33 = ssub.s32 2048, 2048
      %34 = vsyncadd [#allocation7], %s33
      %s35 = sshll.u32 [#allocation6], 4
      %s36 = int_to_ptr.vmem [resolvable:$true] %s35
      %41 = dma.hbm_to_vmem [thread:$0]  %s3, 2048, %s36, [#allocation7], 128, 128, 8
    $region17: #{_gru_sequence_impl.1} parent=1 // pred_fallthru
      _
    // Predicated region
    $region18: #{_gru_sequence_impl.1} parent=1 // pred_check
      _
    $region19: #{_gru_sequence_impl.1} parent=1 // pred_check_branch
      %43 = sbr.rel (0) target = $region21
    $region20: #{_gru_sequence_impl.1} parent=1 // pred_region
      %s45 = ssub.s32 1024, 1024
      %46 = vsyncadd [#allocation7], %s45
      %s47 = sshll.u32 [#allocation8], 4
      %s48 = int_to_ptr.vmem [resolvable:$true] %s47
      %53 = dma.hbm_to_vmem [thread:$0]  %s4, 1024, %s48, [#allocation7], 64, 64, 4
    $region21: #{_gru_sequence_impl.1} parent=1 // pred_fallthru
      _
    // Predicated region
    $region22: #{_gru_sequence_impl.1} parent=1 // pred_check
      _
    $region23: #{_gru_sequence_impl.1} parent=1 // pred_check_branch
      %55 = sbr.rel (0) target = $region25
    $region24: #{_gru_sequence_impl.1} parent=1 // pred_region
      _
    $region25: #{_gru_sequence_impl.1} parent=1 // pred_fallthru
      _
    // Predicated region
    $region26: #{_gru_sequence_impl.1} parent=1 // pred_check
      _
    $region27: #{_gru_sequence_impl.1} parent=1 // pred_check_branch
      %57 = sbr.rel (0) target = $region29
    $region28: #{_gru_sequence_impl.1} parent=1 // pred_region
      %58 = dma.done [#allocation4], 384
    $region29: #{_gru_sequence_impl.1} parent=1 // pred_fallthru
      _
    // Predicated region
    $region30: #{_gru_sequence_impl.1} parent=1 // pred_check
      _
    $region31: #{_gru_sequence_impl.1} parent=1 // pred_check_branch
      %60 = sbr.rel (0) target = $region33
    $region32: #{_gru_sequence_impl.1} parent=1 // pred_region
      %61 = dma.done [#allocation7], 2048
    $region33: #{_gru_sequence_impl.1} parent=1 // pred_fallthru
      _
    // Predicated region
    $region34: #{_gru_sequence_impl.1} parent=1 // pred_check
      _
    $region35: #{_gru_sequence_impl.1} parent=1 // pred_check_branch
      %63 = sbr.rel (0) target = $region37
    $region36: #{_gru_sequence_impl.1} parent=1 // pred_region
      %64 = dma.done [#allocation7], 1024
    $region37: #{_gru_sequence_impl.1} parent=1 // pred_fallthru
      _
    %p66 = scmp.eq.s32.totalorder 0, 0
    // Predicated region
    $region38: #{_gru_sequence_impl.1} parent=1 // pred_check
      %p67 = pneg %p66
    $region39: #{_gru_sequence_impl.1} parent=1 // pred_check_branch
      %69 = sbr.rel (%p67) target = $region41
    $region40: #{_gru_sequence_impl.1} parent=1 // pred_region
      %v70 = vld [vmem:[%s1] sm:$0xff]
      %71 = vst [vmem:[#allocation2] sm:$0xff] %v70
    $region41: #{_gru_sequence_impl.1} parent=1 // pred_fallthru
      _
    %v72 = vld [vmem:[#allocation2] sm:$0xff]
    %v73 = vld [vmem:[%s0] sm:$0xff]
    %v74 = vpack.c.bf16 %v73, %v73
    %v75 = vld [vmem:[#allocation3] sm:$0xff]
    %v76 = vld [vmem:[#allocation3 + $0x8] sm:$0xf]
    %v77 = vld [vmem:[#allocation3 + $0xc] sm:$0xff]
    %v78 = vld [vmem:[#allocation3 + $0x14] sm:$0xf]
    %v79 = vld [vmem:[%s5] sm:$0x7]
    %v81 = vlaneseq
    %v82 = vshrl.u32 %v81, 7
    %v83 = vsub.s32 0, %v82
    %v84 = vrot.slane %v79, %v83
    %v85 = vlaneseq
    %v86 = vshrl.u32 %v85, 7
    %v87 = vsub.s32 1, %v86
    %v88 = vrot.slane %v79, %v87
    %v89 = vlaneseq
    %v90 = vshrl.u32 %v89, 7
    %v91 = vsub.s32 2, %v90
    %v92 = vrot.slane %v79, %v91
    %v100 = vunpack.c.l.b16 %v75
    %v101 = vunpack.c.h.b16 %v75
    %v102 = vunpack.c.l.b16 %v76
    %v103 = vunpack.c.l.b16 %v77
    %v104 = vunpack.c.h.b16 %v77
    %v105 = vunpack.c.l.b16 %v78
    %v106 = vpack.c.b16 %v103, %v100
    %v107 = vpack.c.b16 %v104, %v101
    %v108 = vpack.c.b16 %v105, %v102
    %vm112 = vcmask 130048
    %v114 = vsel %vm112, %v74, 0
    %116 = vmatprep.subr.bf16.mxu0 0
    %117 = vmatpush1.bf16.msra.mxu0 0
    %118 = vmatprep.subr.bf16.mxu0 0
    %119 = vmatpush1.bf16.msra.mxu0 0
    %120 = vmatprep.subr.bf16.mxu0 0
    %121 = vmatpush1.bf16.msra.mxu0 0
    %122 = vmatprep.subr.bf16.mxu0 0
    %123 = vmatpush1.bf16.msra.mxu0 0
    %124 = vmatprep.subr.bf16.mxu0 0
    %125 = vmatpush1.bf16.msra.mxu0 0
    %126 = vmatprep.subr.bf16.mxu0 0
    %127 = vmatpush1.bf16.msra.mxu0 0
    %128 = vmatprep.subr.bf16.mxu0 0
    %129 = vmatpush1.bf16.msra.mxu0 0
    %130 = vmatprep.subr.bf16.mxu0 %v107
    %131 = vmatpush1.bf16.msra.mxu0 %v106
    %132 = vmatprep.subr.bf16.mxu0 0
    %133 = vmatpush2.bf16.msra.mxu0 0
    %134 = vmatprep.subr.bf16.mxu0 0
    %135 = vmatpush2.bf16.msra.mxu0 0
    %136 = vmatprep.subr.bf16.mxu0 0
    %137 = vmatpush2.bf16.msra.mxu0 0
    %138 = vmatprep.subr.bf16.mxu0 0
    %139 = vmatpush2.bf16.msra.mxu0 0
    %140 = vmatprep.subr.bf16.mxu0 0
    %141 = vmatpush2.bf16.msra.mxu0 0
    %142 = vmatprep.subr.bf16.mxu0 0
    %143 = vmatpush2.bf16.msra.mxu0 0
    %144 = vmatprep.subr.bf16.mxu0 0
    %145 = vmatpush2.bf16.msra.mxu0 0
    %146 = vmatprep.subr.bf16.mxu0 0
    %147 = vmatpush2.bf16.msra.mxu0 0
    %148 = vmatprep.mubr.bf16.mxu0 0
    %149 = vmatmul.mubr.bf16.gmra.mxu0 %v114
    %v150 = vpop.f32.mrf.mxu0
    %v151 = vadd.f32 %v84, %v150
    %v152 = vpop.f32.mrf.mxu0
    %v153 = vadd.f32 %v88, %v152
    %v154 = vpop.f32.mrf.mxu0
    %v155 = vpop.f32.mrf.mxu0
    %156 = vdwg.mxu0
    %157 = vmatprep.subr.bf16.mxu0 0
    %158 = vmatpush1.bf16.msra.mxu0 0
    %159 = vmatprep.subr.bf16.mxu0 0
    %160 = vmatpush1.bf16.msra.mxu0 0
    %161 = vmatprep.subr.bf16.mxu0 0
    %162 = vmatpush1.bf16.msra.mxu0 0
    %163 = vmatprep.subr.bf16.mxu0 0
    %164 = vmatpush1.bf16.msra.mxu0 0
    %165 = vmatprep.subr.bf16.mxu0 0
    %166 = vmatpush1.bf16.msra.mxu0 0
    %167 = vmatprep.subr.bf16.mxu0 0
    %168 = vmatpush1.bf16.msra.mxu0 0
    %169 = vmatprep.subr.bf16.mxu0 0
    %170 = vmatpush1.bf16.msra.mxu0 0
    %171 = vmatprep.subr.bf16.mxu0 0
    %172 = vmatpush1.bf16.msra.mxu0 %v108
    %173 = vmatprep.subr.bf16.mxu0 0
    %174 = vmatpush2.bf16.msra.mxu0 0
    %175 = vmatprep.subr.bf16.mxu0 0
    %176 = vmatpush2.bf16.msra.mxu0 0
    %177 = vmatprep.subr.bf16.mxu0 0
    %178 = vmatpush2.bf16.msra.mxu0 0
    %179 = vmatprep.subr.bf16.mxu0 0
    %180 = vmatpush2.bf16.msra.mxu0 0
    %181 = vmatprep.subr.bf16.mxu0 0
    %182 = vmatpush2.bf16.msra.mxu0 0
    %183 = vmatprep.subr.bf16.mxu0 0
    %184 = vmatpush2.bf16.msra.mxu0 0
    %185 = vmatprep.subr.bf16.mxu0 0
    %186 = vmatpush2.bf16.msra.mxu0 0
    %187 = vmatprep.subr.bf16.mxu0 0
    %188 = vmatpush2.bf16.msra.mxu0 0
    %189 = vmatprep.mubr.bf16.mxu0 0
    %190 = vmatmul.mubr.bf16.gmra.mxu0 %v114
    %v191 = vpop.f32.mrf.mxu0
    %v192 = vadd.f32 %v92, %v191
    %v193 = vpop.f32.mrf.mxu0
    %v194 = vpop.f32.mrf.mxu0
    %v195 = vpop.f32.mrf.mxu0
    %196 = vdwg.mxu0
    %v197 = vpack.c.bf16 %v72, %v72
    %v198 = vld [vmem:[#allocation6] sm:$0xff]
    %v199 = vld [vmem:[#allocation6 + $0x8] sm:$0xff]
    %v200 = vld [vmem:[#allocation6 + $0x10] sm:$0xff]
    %v201 = vld [vmem:[#allocation6 + $0x18] sm:$0xff]
    %v202 = vld [vmem:[#allocation6 + $0x20] sm:$0xff]
    %v203 = vld [vmem:[#allocation6 + $0x28] sm:$0xff]
    %v204 = vld [vmem:[#allocation6 + $0x30] sm:$0xff]
    %v205 = vld [vmem:[#allocation6 + $0x38] sm:$0xff]
    %v206 = vld [vmem:[#allocation6 + $0x40] sm:$0xff]
    %v207 = vld [vmem:[#allocation6 + $0x48] sm:$0xff]
    %v208 = vld [vmem:[#allocation6 + $0x50] sm:$0xff]
    %v209 = vld [vmem:[#allocation6 + $0x58] sm:$0xff]
    %v210 = vld [vmem:[#allocation6 + $0x60] sm:$0xff]
    %v211 = vld [vmem:[#allocation6 + $0x68] sm:$0xff]
    %v212 = vld [vmem:[#allocation6 + $0x70] sm:$0xff]
    %v213 = vld [vmem:[#allocation6 + $0x78] sm:$0xff]
    %v230 = vunpack.c.l.b16 %v198
    %v231 = vunpack.c.h.b16 %v198
    %v232 = vunpack.c.l.b16 %v199
    %v233 = vunpack.c.h.b16 %v199
    %v234 = vunpack.c.l.b16 %v200
    %v235 = vunpack.c.h.b16 %v200
    %v236 = vunpack.c.l.b16 %v201
    %v237 = vunpack.c.h.b16 %v201
    %v238 = vunpack.c.l.b16 %v202
    %v239 = vunpack.c.h.b16 %v202
    %v240 = vunpack.c.l.b16 %v203
    %v241 = vunpack.c.h.b16 %v203
    %v242 = vunpack.c.l.b16 %v204
    %v243 = vunpack.c.h.b16 %v204
    %v244 = vunpack.c.l.b16 %v205
    %v245 = vunpack.c.h.b16 %v205
    %v246 = vunpack.c.l.b16 %v206
    %v247 = vunpack.c.h.b16 %v206
    %v248 = vunpack.c.l.b16 %v207
    %v249 = vunpack.c.h.b16 %v207
    %v250 = vunpack.c.l.b16 %v208
    %v251 = vunpack.c.h.b16 %v208
    %v252 = vunpack.c.l.b16 %v209
    %v253 = vunpack.c.h.b16 %v209
    %v254 = vunpack.c.l.b16 %v210
    %v255 = vunpack.c.h.b16 %v210
    %v256 = vunpack.c.l.b16 %v211
    %v257 = vunpack.c.h.b16 %v211
    %v258 = vunpack.c.l.b16 %v212
    %v259 = vunpack.c.h.b16 %v212
    %v260 = vunpack.c.l.b16 %v213
    %v261 = vunpack.c.h.b16 %v213
    %v262 = vpack.c.b16 %v232, %v230
    %v263 = vpack.c.b16 %v233, %v231
    %v264 = vpack.c.b16 %v236, %v234
    %v265 = vpack.c.b16 %v237, %v235
    %v266 = vpack.c.b16 %v240, %v238
    %v267 = vpack.c.b16 %v241, %v239
    %v268 = vpack.c.b16 %v244, %v242
    %v269 = vpack.c.b16 %v245, %v243
    %v270 = vpack.c.b16 %v248, %v246
    %v271 = vpack.c.b16 %v249, %v247
    %v272 = vpack.c.b16 %v252, %v250
    %v273 = vpack.c.b16 %v253, %v251
    %v274 = vpack.c.b16 %v256, %v254
    %v275 = vpack.c.b16 %v257, %v255
    %v276 = vpack.c.b16 %v260, %v258
    %v277 = vpack.c.b16 %v261, %v259
    %294 = vmatprep.subr.bf16.mxu0 %v277
    %295 = vmatpush1.bf16.msra.mxu0 %v276
    %296 = vmatprep.subr.bf16.mxu0 %v275
    %297 = vmatpush1.bf16.msra.mxu0 %v274
    %298 = vmatprep.subr.bf16.mxu0 %v273
    %299 = vmatpush1.bf16.msra.mxu0 %v272
    %300 = vmatprep.subr.bf16.mxu0 %v271
    %301 = vmatpush1.bf16.msra.mxu0 %v270
    %302 = vmatprep.subr.bf16.mxu0 %v269
    %303 = vmatpush1.bf16.msra.mxu0 %v268
    %304 = vmatprep.subr.bf16.mxu0 %v267
    %305 = vmatpush1.bf16.msra.mxu0 %v266
    %306 = vmatprep.subr.bf16.mxu0 %v265
    %307 = vmatpush1.bf16.msra.mxu0 %v264
    %308 = vmatprep.subr.bf16.mxu0 %v263
    %309 = vmatpush1.bf16.msra.mxu0 %v262
    %310 = vmatprep.subr.bf16.mxu0 0
    %311 = vmatpush2.bf16.msra.mxu0 0
    %312 = vmatprep.subr.bf16.mxu0 0
    %313 = vmatpush2.bf16.msra.mxu0 0
    %314 = vmatprep.subr.bf16.mxu0 0
    %315 = vmatpush2.bf16.msra.mxu0 0
    %316 = vmatprep.subr.bf16.mxu0 0
    %317 = vmatpush2.bf16.msra.mxu0 0
    %318 = vmatprep.subr.bf16.mxu0 0
    %319 = vmatpush2.bf16.msra.mxu0 0
    %320 = vmatprep.subr.bf16.mxu0 0
    %321 = vmatpush2.bf16.msra.mxu0 0
    %322 = vmatprep.subr.bf16.mxu0 0
    %323 = vmatpush2.bf16.msra.mxu0 0
    %324 = vmatprep.subr.bf16.mxu0 0
    %325 = vmatpush2.bf16.msra.mxu0 0
    %326 = vmatprep.mubr.bf16.mxu0 0
    %327 = vmatmul.mubr.bf16.gmra.mxu0 %v197
    %v328 = vpop.f32.mrf.mxu0
    %v329 = vadd.f32 0.0, %v328
    %v330 = vpop.f32.mrf.mxu0
    %v331 = vadd.f32 0.0, %v330
    %v332 = vpop.f32.mrf.mxu0
    %v333 = vpop.f32.mrf.mxu0
    %334 = vdwg.mxu0
    %v335 = vadd.f32 %v151, %v329
    %v336 = vadd.f32 %v153, %v331
    %v337 = vxor.u32 %v335, 2147483648
    %v338 = vxor.u32 %v336, 2147483648
    %v339 = vmul.f32 %v337, 1.442695
    %v340 = vpow.pop %v339
    %v341 = vmul.f32 %v338, 1.442695
    %v342 = vpow.pop %v341
    %v343 = vadd.f32 %v340, 1.0
    %v344 = vadd.f32 %v342, 1.0
    %v345 = vrcp.pop %v343
    %v346 = vmul.f32 1.0, %v345
    %v347 = vrcp.pop %v344
    %v348 = vmul.f32 1.0, %v347
    %v349 = vmul.f32 %v346, %v72
    %v350 = vpack.c.bf16 %v349, %v349
    %v351 = vld [vmem:[#allocation8] sm:$0xf]
    %v352 = vld [vmem:[#allocation8 + $0x4] sm:$0xf]
    %v353 = vld [vmem:[#allocation8 + $0x8] sm:$0xf]
    %v354 = vld [vmem:[#allocation8 + $0xc] sm:$0xf]
    %v355 = vld [vmem:[#allocation8 + $0x10] sm:$0xf]
    %v356 = vld [vmem:[#allocation8 + $0x14] sm:$0xf]
    %v357 = vld [vmem:[#allocation8 + $0x18] sm:$0xf]
    %v358 = vld [vmem:[#allocation8 + $0x1c] sm:$0xf]
    %v359 = vld [vmem:[#allocation8 + $0x20] sm:$0xf]
    %v360 = vld [vmem:[#allocation8 + $0x24] sm:$0xf]
    %v361 = vld [vmem:[#allocation8 + $0x28] sm:$0xf]
    %v362 = vld [vmem:[#allocation8 + $0x2c] sm:$0xf]
    %v363 = vld [vmem:[#allocation8 + $0x30] sm:$0xf]
    %v364 = vld [vmem:[#allocation8 + $0x34] sm:$0xf]
    %v365 = vld [vmem:[#allocation8 + $0x38] sm:$0xf]
    %v366 = vld [vmem:[#allocation8 + $0x3c] sm:$0xf]
    %v383 = vunpack.c.l.b16 %v351
    %v384 = vunpack.c.l.b16 %v352
    %v385 = vunpack.c.l.b16 %v353
    %v386 = vunpack.c.l.b16 %v354
    %v387 = vunpack.c.l.b16 %v355
    %v388 = vunpack.c.l.b16 %v356
    %v389 = vunpack.c.l.b16 %v357
    %v390 = vunpack.c.l.b16 %v358
    %v391 = vunpack.c.l.b16 %v359
    %v392 = vunpack.c.l.b16 %v360
    %v393 = vunpack.c.l.b16 %v361
    %v394 = vunpack.c.l.b16 %v362
    %v395 = vunpack.c.l.b16 %v363
    %v396 = vunpack.c.l.b16 %v364
    %v397 = vunpack.c.l.b16 %v365
    %v398 = vunpack.c.l.b16 %v366
    %v399 = vpack.c.b16 %v384, %v383
    %v400 = vpack.c.b16 %v386, %v385
    %v401 = vpack.c.b16 %v388, %v387
    %v402 = vpack.c.b16 %v390, %v389
    %v403 = vpack.c.b16 %v392, %v391
    %v404 = vpack.c.b16 %v394, %v393
    %v405 = vpack.c.b16 %v396, %v395
    %v406 = vpack.c.b16 %v398, %v397
    %415 = vmatprep.subr.bf16.mxu0 0
    %416 = vmatpush1.bf16.msra.mxu0 %v406
    %417 = vmatprep.subr.bf16.mxu0 0
    %418 = vmatpush1.bf16.msra.mxu0 %v405
    %419 = vmatprep.subr.bf16.mxu0 0
    %420 = vmatpush1.bf16.msra.mxu0 %v404
    %421 = vmatprep.subr.bf16.mxu0 0
    %422 = vmatpush1.bf16.msra.mxu0 %v403
    %423 = vmatprep.subr.bf16.mxu0 0
    %424 = vmatpush1.bf16.msra.mxu0 %v402
    %425 = vmatprep.subr.bf16.mxu0 0
    %426 = vmatpush1.bf16.msra.mxu0 %v401
    %427 = vmatprep.subr.bf16.mxu0 0
    %428 = vmatpush1.bf16.msra.mxu0 %v400
    %429 = vmatprep.subr.bf16.mxu0 0
    %430 = vmatpush1.bf16.msra.mxu0 %v399
    %431 = vmatprep.subr.bf16.mxu0 0
    %432 = vmatpush2.bf16.msra.mxu0 0
    %433 = vmatprep.subr.bf16.mxu0 0
    %434 = vmatpush2.bf16.msra.mxu0 0
    %435 = vmatprep.subr.bf16.mxu0 0
    %436 = vmatpush2.bf16.msra.mxu0 0
    %437 = vmatprep.subr.bf16.mxu0 0
    %438 = vmatpush2.bf16.msra.mxu0 0
    %439 = vmatprep.subr.bf16.mxu0 0
    %440 = vmatpush2.bf16.msra.mxu0 0
    %441 = vmatprep.subr.bf16.mxu0 0
    %442 = vmatpush2.bf16.msra.mxu0 0
    %443 = vmatprep.subr.bf16.mxu0 0
    %444 = vmatpush2.bf16.msra.mxu0 0
    %445 = vmatprep.subr.bf16.mxu0 0
    %446 = vmatpush2.bf16.msra.mxu0 0
    %447 = vmatprep.mubr.bf16.mxu0 0
    %448 = vmatmul.mubr.bf16.gmra.mxu0 %v350
    %v449 = vpop.f32.mrf.mxu0
    %v450 = vadd.f32 0.0, %v449
    %v451 = vpop.f32.mrf.mxu0
    %v452 = vpop.f32.mrf.mxu0
    %v453 = vpop.f32.mrf.mxu0
    %454 = vdwg.mxu0
    %v455 = vadd.f32 %v192, %v450
    %v456 = vtanh.pop %v455
    %v457 = vsub.f32 %v72, %v456
    %v458 = vmul.f32 %v348, %v457
    %v459 = vadd.f32 %v456, %v458
    %460 = vst [vmem:[#allocation2] sm:$0xff] %v459
    %461 = vst [vmem:[#allocation9] sm:$0xff] %v459
    // Predicated region
    $region42: #{_gru_sequence_impl.1} parent=1 // pred_check
      _
    $region43: #{_gru_sequence_impl.1} parent=1 // pred_check_branch
      %463 = sbr.rel (0) target = $region45
    $region44: #{_gru_sequence_impl.1} parent=1 // pred_region
      %s465 = ssub.s32 128, 128
      %466 = vsyncadd [#allocation5], %s465
      %s468 = sshll.u32 [#allocation9], 4
      %s469 = int_to_ptr.vmem [resolvable:$true] %s468
      %471 = dma.vmem_to_hbm [thread:$0]  %s469, 128, %s6, [#allocation5]
    $region45: #{_gru_sequence_impl.1} parent=1 // pred_fallthru
      _
    // Predicated region
    $region46: #{_gru_sequence_impl.1} parent=1 // pred_check
      _
    $region47: #{_gru_sequence_impl.1} parent=1 // pred_check_branch
      %473 = sbr.rel (0) target = $region49
    $region48: #{_gru_sequence_impl.1} parent=1 // pred_region
      %474 = dma.done [#allocation5], 128
    $region49: #{_gru_sequence_impl.1} parent=1 // pred_fallthru
      _
    %475 = vsyncpa [#allocation4], 1
    %476 = vsyncpa [#allocation7], 1
    %477 = vsyncpa [#allocation5], 1

// kernel: _gru_sequence_impl.1
$region0: #{_gru_sequence_impl.1}
  #allocation0 [shape = 'u32[]', space=smem, size = 0x4, offset = 0x4, fixed_abs, tag = 'smem constant byte address 0x4 - core index']
  #allocation1 [shape = 'u32[144,128]{1,0:T(1,128)}', space=vmem, size = 0x12000, scoped, tag = 'internal scratch']
  #allocation2 [shape = 'f32[8,128]{1,0:T(8,128)}', space=vmem, size = 0x1000, scoped, tag = 'scratch operand']
  %s0 = inlined_call_operand.vmem [shape: f32[1,8,16], index: 0, kind: input, shape index: {}]
  %s1 = inlined_call_operand.vmem [shape: f32[8,128], index: 1, kind: input, shape index: {}]
  %s2 = inlined_call_operand.hbm [shape: bf16[16,384], index: 2, kind: input, shape index: {}]
  %s3 = inlined_call_operand.hbm [shape: bf16[128,256], index: 3, kind: input, shape index: {}]
  %s4 = inlined_call_operand.hbm [shape: bf16[128,128], index: 4, kind: input, shape index: {}]
  %s5 = inlined_call_operand.vmem [shape: f32[1,384], index: 5, kind: input, shape index: {}]
  %s6 = inlined_call_operand.hbm [shape: f32[1,8,128], index: 6, kind: output, shape index: {}]
  %s7 = sld [smem:[#allocation0]]
  $region50: #{_gru_sequence_impl.1} parent=0
    _
  %s9 = ssub.s32 1, %s7
  %s10 = scalar_select 0, %s9, %s7
  $region1: #{_gru_sequence_impl.1} parent=0
    #allocation3 [shape = 'u8[12288]{0}', space=vmem, size = 0x3000, scoped, tag = 'input window, operand 2, single buffered']
    #allocation4 [shape = 's32[1]{0}', space=sflag, size = 0x4, scoped, tag = 'scoped memory for _gru_sequence_impl.1']
    #allocation5 [shape = 's32[1]{0}', space=sflag, size = 0x4, scoped, tag = 'scoped memory for _gru_sequence_impl.1']
    #allocation6 [shape = 'u8[65536]{0}', space=vmem, size = 0x10000, scoped, tag = 'input window, operand 3, single buffered']
    #allocation7 [shape = 's32[1]{0}', space=sflag, size = 0x4, scoped, tag = 'scoped memory for _gru_sequence_impl.1']
    #allocation8 [shape = 'u8[32768]{0}', space=vmem, size = 0x8000, scoped, tag = 'input window, operand 4, single buffered']
    #allocation9 [shape = 'u8[4096]{0}', space=vmem, size = 0x1000, scoped, tag = 'output window, operand 0, single buffered']
    %11 = vsyncpa [#allocation4], 0
    %12 = vsyncpa [#allocation7], 0
    %13 = vsyncpa [#allocation5], 0
    // Predicated region
    $region2: #{_gru_sequence_impl.1} parent=1 // pred_check
      _
    $region3: #{_gru_sequence_impl.1} parent=1 // pred_check_branch
      %15 = sbr.rel (0) target = $region5
    $region4: #{_gru_sequence_impl.1} parent=1 // pred_region
      _
    $region5: #{_gru_sequence_impl.1} parent=1 // pred_fallthru
      _
    // Predicated region
    $region6: #{_gru_sequence_impl.1} parent=1 // pred_check
      _
    $region7: #{_gru_sequence_impl.1} parent=1 // pred_check_branch
      %17 = sbr.rel (0) target = $region9
    $region8: #{_gru_sequence_impl.1} parent=1 // pred_region
      _
    $region9: #{_gru_sequence_impl.1} parent=1 // pred_fallthru
      _
    // Predicated region
    $region10: #{_gru_sequence_impl.1} parent=1 // pred_check
      _
    $region11: #{_gru_sequence_impl.1} parent=1 // pred_check_branch
      %19 = sbr.rel (0) target = $region13
    $region12: #{_gru_sequence_impl.1} parent=1 // pred_region
      %s21 = ssub.s32 384, 384
      %22 = vsyncadd [#allocation4], %s21
      %s23 = sshll.u32 [#allocation3], 4
      %s24 = int_to_ptr.vmem [resolvable:$true] %s23
      %29 = dma.hbm_to_vmem [thread:$0]  %s2, 384, %s24, [#allocation4], 192, 192, 12
    $region13: #{_gru_sequence_impl.1} parent=1 // pred_fallthru
      _
    // Predicated region
    $region14: #{_gru_sequence_impl.1} parent=1 // pred_check
      _
    $region15: #{_gru_sequence_impl.1} parent=1 // pred_check_branch
      %31 = sbr.rel (0) target = $region17
    $region16: #{_gru_sequence_impl.1} parent=1 // pred_region
      %s33 = ssub.s32 2048, 2048
      %34 = vsyncadd [#allocation7], %s33
      %s35 = sshll.u32 [#allocation6], 4
      %s36 = int_to_ptr.vmem [resolvable:$true] %s35
      %41 = dma.hbm_to_vmem [thread:$0]  %s3, 2048, %s36, [#allocation7], 128, 128, 8
    $region17: #{_gru_sequence_impl.1} parent=1 // pred_fallthru
      _
    // Predicated region
    $region18: #{_gru_sequence_impl.1} parent=1 // pred_check
      _
    $region19: #{_gru_sequence_impl.1} parent=1 // pred_check_branch
      %43 = sbr.rel (0) target = $region21
    $region20: #{_gru_sequence_impl.1} parent=1 // pred_region
      %s45 = ssub.s32 1024, 1024
      %46 = vsyncadd [#allocation7], %s45
      %s47 = sshll.u32 [#allocation8], 4
      %s48 = int_to_ptr.vmem [resolvable:$true] %s47
      %53 = dma.hbm_to_vmem [thread:$0]  %s4, 1024, %s48, [#allocation7], 64, 64, 4
    $region21: #{_gru_sequence_impl.1} parent=1 // pred_fallthru
      _
    // Predicated region
    $region22: #{_gru_sequence_impl.1} parent=1 // pred_check
      _
    $region23: #{_gru_sequence_impl.1} parent=1 // pred_check_branch
      %55 = sbr.rel (0) target = $region25
    $region24: #{_gru_sequence_impl.1} parent=1 // pred_region
      _
    $region25: #{_gru_sequence_impl.1} parent=1 // pred_fallthru
      _
    // Predicated region
    $region26: #{_gru_sequence_impl.1} parent=1 // pred_check
      _
    $region27: #{_gru_sequence_impl.1} parent=1 // pred_check_branch
      %57 = sbr.rel (0) target = $region29
    $region28: #{_gru_sequence_impl.1} parent=1 // pred_region
      %58 = dma.done [#allocation4], 384
    $region29: #{_gru_sequence_impl.1} parent=1 // pred_fallthru
      _
    // Predicated region
    $region30: #{_gru_sequence_impl.1} parent=1 // pred_check
      _
    $region31: #{_gru_sequence_impl.1} parent=1 // pred_check_branch
      %60 = sbr.rel (0) target = $region33
    $region32: #{_gru_sequence_impl.1} parent=1 // pred_region
      %61 = dma.done [#allocation7], 2048
    $region33: #{_gru_sequence_impl.1} parent=1 // pred_fallthru
      _
    // Predicated region
    $region34: #{_gru_sequence_impl.1} parent=1 // pred_check
      _
    $region35: #{_gru_sequence_impl.1} parent=1 // pred_check_branch
      %63 = sbr.rel (0) target = $region37
    $region36: #{_gru_sequence_impl.1} parent=1 // pred_region
      %64 = dma.done [#allocation7], 1024
    $region37: #{_gru_sequence_impl.1} parent=1 // pred_fallthru
      _
    %p66 = scmp.eq.s32.totalorder 0, 0
    // Predicated region
    $region38: #{_gru_sequence_impl.1} parent=1 // pred_check
      %p67 = pneg %p66
    $region39: #{_gru_sequence_impl.1} parent=1 // pred_check_branch
      %69 = sbr.rel (%p67) target = $region41
    $region40: #{_gru_sequence_impl.1} parent=1 // pred_region
      %v70 = vld [vmem:[%s1] sm:$0xff]
      %71 = vst [vmem:[#allocation2] sm:$0xff] %v70
    $region41: #{_gru_sequence_impl.1} parent=1 // pred_fallthru
      _
    %v72 = vld [vmem:[#allocation2] sm:$0xff]
    %v73 = vld [vmem:[%s0] sm:$0xff]
    %v74 = vpack.c.bf16 %v73, %v73
    %v75 = vld [vmem:[#allocation3] sm:$0xff]
    %v76 = vld [vmem:[#allocation3 + $0x8] sm:$0xf]
    %v77 = vld [vmem:[#allocation3 + $0xc] sm:$0xff]
    %v78 = vld [vmem:[#allocation3 + $0x14] sm:$0xf]
    %v79 = vld [vmem:[%s5] sm:$0x7]
    %v81 = vlaneseq
    %v82 = vshrl.u32 %v81, 7
    %v83 = vsub.s32 0, %v82
    %v84 = vrot.slane %v79, %v83
    %v85 = vlaneseq
    %v86 = vshrl.u32 %v85, 7
    %v87 = vsub.s32 1, %v86
    %v88 = vrot.slane %v79, %v87
    %v89 = vlaneseq
    %v90 = vshrl.u32 %v89, 7
    %v91 = vsub.s32 2, %v90
    %v92 = vrot.slane %v79, %v91
    %v100 = vunpack.c.l.b16 %v75
    %v101 = vunpack.c.h.b16 %v75
    %v102 = vunpack.c.l.b16 %v76
    %v103 = vunpack.c.l.b16 %v77
    %v104 = vunpack.c.h.b16 %v77
    %v105 = vunpack.c.l.b16 %v78
    %v106 = vpack.c.b16 %v103, %v100
    %v107 = vpack.c.b16 %v104, %v101
    %v108 = vpack.c.b16 %v105, %v102
    %vm112 = vcmask 130048
    %v114 = vsel %vm112, %v74, 0
    %116 = vmatprep.subr.bf16.mxu0 0
    %117 = vmatpush1.bf16.msra.mxu0 0
    %118 = vmatprep.subr.bf16.mxu0 0
    %119 = vmatpush1.bf16.msra.mxu0 0
    %120 = vmatprep.subr.bf16.mxu0 0
    %121 = vmatpush1.bf16.msra.mxu0 0
    %122 = vmatprep.subr.bf16.mxu0 0
    %123 = vmatpush1.bf16.msra.mxu0 0
    %124 = vmatprep.subr.bf16.mxu0 0
    %125 = vmatpush1.bf16.msra.mxu0 0
    %126 = vmatprep.subr.bf16.mxu0 0
    %127 = vmatpush1.bf16.msra.mxu0 0
    %128 = vmatprep.subr.bf16.mxu0 0
    %129 = vmatpush1.bf16.msra.mxu0 0
    %130 = vmatprep.subr.bf16.mxu0 %v107
    %131 = vmatpush1.bf16.msra.mxu0 %v106
    %132 = vmatprep.subr.bf16.mxu0 0
    %133 = vmatpush2.bf16.msra.mxu0 0
    %134 = vmatprep.subr.bf16.mxu0 0
    %135 = vmatpush2.bf16.msra.mxu0 0
    %136 = vmatprep.subr.bf16.mxu0 0
    %137 = vmatpush2.bf16.msra.mxu0 0
    %138 = vmatprep.subr.bf16.mxu0 0
    %139 = vmatpush2.bf16.msra.mxu0 0
    %140 = vmatprep.subr.bf16.mxu0 0
    %141 = vmatpush2.bf16.msra.mxu0 0
    %142 = vmatprep.subr.bf16.mxu0 0
    %143 = vmatpush2.bf16.msra.mxu0 0
    %144 = vmatprep.subr.bf16.mxu0 0
    %145 = vmatpush2.bf16.msra.mxu0 0
    %146 = vmatprep.subr.bf16.mxu0 0
    %147 = vmatpush2.bf16.msra.mxu0 0
    %148 = vmatprep.mubr.bf16.mxu0 0
    %149 = vmatmul.mubr.bf16.gmra.mxu0 %v114
    %v150 = vpop.f32.mrf.mxu0
    %v151 = vadd.f32 %v84, %v150
    %v152 = vpop.f32.mrf.mxu0
    %v153 = vadd.f32 %v88, %v152
    %v154 = vpop.f32.mrf.mxu0
    %v155 = vpop.f32.mrf.mxu0
    %156 = vdwg.mxu0
    %157 = vmatprep.subr.bf16.mxu0 0
    %158 = vmatpush1.bf16.msra.mxu0 0
    %159 = vmatprep.subr.bf16.mxu0 0
    %160 = vmatpush1.bf16.msra.mxu0 0
    %161 = vmatprep.subr.bf16.mxu0 0
    %162 = vmatpush1.bf16.msra.mxu0 0
    %163 = vmatprep.subr.bf16.mxu0 0
    %164 = vmatpush1.bf16.msra.mxu0 0
    %165 = vmatprep.subr.bf16.mxu0 0
    %166 = vmatpush1.bf16.msra.mxu0 0
    %167 = vmatprep.subr.bf16.mxu0 0
    %168 = vmatpush1.bf16.msra.mxu0 0
    %169 = vmatprep.subr.bf16.mxu0 0
    %170 = vmatpush1.bf16.msra.mxu0 0
    %171 = vmatprep.subr.bf16.mxu0 0
    %172 = vmatpush1.bf16.msra.mxu0 %v108
    %173 = vmatprep.subr.bf16.mxu0 0
    %174 = vmatpush2.bf16.msra.mxu0 0
    %175 = vmatprep.subr.bf16.mxu0 0
    %176 = vmatpush2.bf16.msra.mxu0 0
    %177 = vmatprep.subr.bf16.mxu0 0
    %178 = vmatpush2.bf16.msra.mxu0 0
    %179 = vmatprep.subr.bf16.mxu0 0
    %180 = vmatpush2.bf16.msra.mxu0 0
    %181 = vmatprep.subr.bf16.mxu0 0
    %182 = vmatpush2.bf16.msra.mxu0 0
    %183 = vmatprep.subr.bf16.mxu0 0
    %184 = vmatpush2.bf16.msra.mxu0 0
    %185 = vmatprep.subr.bf16.mxu0 0
    %186 = vmatpush2.bf16.msra.mxu0 0
    %187 = vmatprep.subr.bf16.mxu0 0
    %188 = vmatpush2.bf16.msra.mxu0 0
    %189 = vmatprep.mubr.bf16.mxu0 0
    %190 = vmatmul.mubr.bf16.gmra.mxu0 %v114
    %v191 = vpop.f32.mrf.mxu0
    %v192 = vadd.f32 %v92, %v191
    %v193 = vpop.f32.mrf.mxu0
    %v194 = vpop.f32.mrf.mxu0
    %v195 = vpop.f32.mrf.mxu0
    %196 = vdwg.mxu0
    %v197 = vpack.c.bf16 %v72, %v72
    %v198 = vld [vmem:[#allocation6] sm:$0xff]
    %v199 = vld [vmem:[#allocation6 + $0x8] sm:$0xff]
    %v200 = vld [vmem:[#allocation6 + $0x10] sm:$0xff]
    %v201 = vld [vmem:[#allocation6 + $0x18] sm:$0xff]
    %v202 = vld [vmem:[#allocation6 + $0x20] sm:$0xff]
    %v203 = vld [vmem:[#allocation6 + $0x28] sm:$0xff]
    %v204 = vld [vmem:[#allocation6 + $0x30] sm:$0xff]
    %v205 = vld [vmem:[#allocation6 + $0x38] sm:$0xff]
    %v206 = vld [vmem:[#allocation6 + $0x40] sm:$0xff]
    %v207 = vld [vmem:[#allocation6 + $0x48] sm:$0xff]
    %v208 = vld [vmem:[#allocation6 + $0x50] sm:$0xff]
    %v209 = vld [vmem:[#allocation6 + $0x58] sm:$0xff]
    %v210 = vld [vmem:[#allocation6 + $0x60] sm:$0xff]
    %v211 = vld [vmem:[#allocation6 + $0x68] sm:$0xff]
    %v212 = vld [vmem:[#allocation6 + $0x70] sm:$0xff]
    %v213 = vld [vmem:[#allocation6 + $0x78] sm:$0xff]
    %v230 = vunpack.c.l.b16 %v198
    %v231 = vunpack.c.h.b16 %v198
    %v232 = vunpack.c.l.b16 %v199
    %v233 = vunpack.c.h.b16 %v199
    %v234 = vunpack.c.l.b16 %v200
    %v235 = vunpack.c.h.b16 %v200
    %v236 = vunpack.c.l.b16 %v201
    %v237 = vunpack.c.h.b16 %v201
    %v238 = vunpack.c.l.b16 %v202
    %v239 = vunpack.c.h.b16 %v202
    %v240 = vunpack.c.l.b16 %v203
    %v241 = vunpack.c.h.b16 %v203
    %v242 = vunpack.c.l.b16 %v204
    %v243 = vunpack.c.h.b16 %v204
    %v244 = vunpack.c.l.b16 %v205
    %v245 = vunpack.c.h.b16 %v205
    %v246 = vunpack.c.l.b16 %v206
    %v247 = vunpack.c.h.b16 %v206
    %v248 = vunpack.c.l.b16 %v207
    %v249 = vunpack.c.h.b16 %v207
    %v250 = vunpack.c.l.b16 %v208
    %v251 = vunpack.c.h.b16 %v208
    %v252 = vunpack.c.l.b16 %v209
    %v253 = vunpack.c.h.b16 %v209
    %v254 = vunpack.c.l.b16 %v210
    %v255 = vunpack.c.h.b16 %v210
    %v256 = vunpack.c.l.b16 %v211
    %v257 = vunpack.c.h.b16 %v211
    %v258 = vunpack.c.l.b16 %v212
    %v259 = vunpack.c.h.b16 %v212
    %v260 = vunpack.c.l.b16 %v213
    %v261 = vunpack.c.h.b16 %v213
    %v262 = vpack.c.b16 %v232, %v230
    %v263 = vpack.c.b16 %v233, %v231
    %v264 = vpack.c.b16 %v236, %v234
    %v265 = vpack.c.b16 %v237, %v235
    %v266 = vpack.c.b16 %v240, %v238
    %v267 = vpack.c.b16 %v241, %v239
    %v268 = vpack.c.b16 %v244, %v242
    %v269 = vpack.c.b16 %v245, %v243
    %v270 = vpack.c.b16 %v248, %v246
    %v271 = vpack.c.b16 %v249, %v247
    %v272 = vpack.c.b16 %v252, %v250
    %v273 = vpack.c.b16 %v253, %v251
    %v274 = vpack.c.b16 %v256, %v254
    %v275 = vpack.c.b16 %v257, %v255
    %v276 = vpack.c.b16 %v260, %v258
    %v277 = vpack.c.b16 %v261, %v259
    %294 = vmatprep.subr.bf16.mxu0 %v277
    %295 = vmatpush1.bf16.msra.mxu0 %v276
    %296 = vmatprep.subr.bf16.mxu0 %v275
    %297 = vmatpush1.bf16.msra.mxu0 %v274
    %298 = vmatprep.subr.bf16.mxu0 %v273
    %299 = vmatpush1.bf16.msra.mxu0 %v272
    %300 = vmatprep.subr.bf16.mxu0 %v271
    %301 = vmatpush1.bf16.msra.mxu0 %v270
    %302 = vmatprep.subr.bf16.mxu0 %v269
    %303 = vmatpush1.bf16.msra.mxu0 %v268
    %304 = vmatprep.subr.bf16.mxu0 %v267
    %305 = vmatpush1.bf16.msra.mxu0 %v266
    %306 = vmatprep.subr.bf16.mxu0 %v265
    %307 = vmatpush1.bf16.msra.mxu0 %v264
    %308 = vmatprep.subr.bf16.mxu0 %v263
    %309 = vmatpush1.bf16.msra.mxu0 %v262
    %310 = vmatprep.subr.bf16.mxu0 0
    %311 = vmatpush2.bf16.msra.mxu0 0
    %312 = vmatprep.subr.bf16.mxu0 0
    %313 = vmatpush2.bf16.msra.mxu0 0
    %314 = vmatprep.subr.bf16.mxu0 0
    %315 = vmatpush2.bf16.msra.mxu0 0
    %316 = vmatprep.subr.bf16.mxu0 0
    %317 = vmatpush2.bf16.msra.mxu0 0
    %318 = vmatprep.subr.bf16.mxu0 0
    %319 = vmatpush2.bf16.msra.mxu0 0
    %320 = vmatprep.subr.bf16.mxu0 0
    %321 = vmatpush2.bf16.msra.mxu0 0
    %322 = vmatprep.subr.bf16.mxu0 0
    %323 = vmatpush2.bf16.msra.mxu0 0
    %324 = vmatprep.subr.bf16.mxu0 0
    %325 = vmatpush2.bf16.msra.mxu0 0
    %326 = vmatprep.mubr.bf16.mxu0 0
    %327 = vmatmul.mubr.bf16.gmra.mxu0 %v197
    %v328 = vpop.f32.mrf.mxu0
    %v329 = vadd.f32 0.0, %v328
    %v330 = vpop.f32.mrf.mxu0
    %v331 = vadd.f32 0.0, %v330
    %v332 = vpop.f32.mrf.mxu0
    %v333 = vpop.f32.mrf.mxu0
    %334 = vdwg.mxu0
    %v335 = vadd.f32 %v151, %v329
    %v336 = vadd.f32 %v153, %v331
    %v337 = vxor.u32 %v335, 2147483648
    %v338 = vxor.u32 %v336, 2147483648
    %v339 = vmul.f32 %v337, 1.442695
    %v340 = vpow.pop %v339
    %v341 = vmul.f32 %v338, 1.442695
    %v342 = vpow.pop %v341
    %v343 = vadd.f32 %v340, 1.0
    %v344 = vadd.f32 %v342, 1.0
    %v345 = vrcp.pop %v343
    %v346 = vmul.f32 1.0, %v345
    %v347 = vrcp.pop %v344
    %v348 = vmul.f32 1.0, %v347
    %v349 = vmul.f32 %v346, %v72
    %v350 = vpack.c.bf16 %v349, %v349
    %v351 = vld [vmem:[#allocation8] sm:$0xf]
    %v352 = vld [vmem:[#allocation8 + $0x4] sm:$0xf]
    %v353 = vld [vmem:[#allocation8 + $0x8] sm:$0xf]
    %v354 = vld [vmem:[#allocation8 + $0xc] sm:$0xf]
    %v355 = vld [vmem:[#allocation8 + $0x10] sm:$0xf]
    %v356 = vld [vmem:[#allocation8 + $0x14] sm:$0xf]
    %v357 = vld [vmem:[#allocation8 + $0x18] sm:$0xf]
    %v358 = vld [vmem:[#allocation8 + $0x1c] sm:$0xf]
    %v359 = vld [vmem:[#allocation8 + $0x20] sm:$0xf]
    %v360 = vld [vmem:[#allocation8 + $0x24] sm:$0xf]
    %v361 = vld [vmem:[#allocation8 + $0x28] sm:$0xf]
    %v362 = vld [vmem:[#allocation8 + $0x2c] sm:$0xf]
    %v363 = vld [vmem:[#allocation8 + $0x30] sm:$0xf]
    %v364 = vld [vmem:[#allocation8 + $0x34] sm:$0xf]
    %v365 = vld [vmem:[#allocation8 + $0x38] sm:$0xf]
    %v366 = vld [vmem:[#allocation8 + $0x3c] sm:$0xf]
    %v383 = vunpack.c.l.b16 %v351
    %v384 = vunpack.c.l.b16 %v352
    %v385 = vunpack.c.l.b16 %v353
    %v386 = vunpack.c.l.b16 %v354
    %v387 = vunpack.c.l.b16 %v355
    %v388 = vunpack.c.l.b16 %v356
    %v389 = vunpack.c.l.b16 %v357
    %v390 = vunpack.c.l.b16 %v358
    %v391 = vunpack.c.l.b16 %v359
    %v392 = vunpack.c.l.b16 %v360
    %v393 = vunpack.c.l.b16 %v361
    %v394 = vunpack.c.l.b16 %v362
    %v395 = vunpack.c.l.b16 %v363
    %v396 = vunpack.c.l.b16 %v364
    %v397 = vunpack.c.l.b16 %v365
    %v398 = vunpack.c.l.b16 %v366
    %v399 = vpack.c.b16 %v384, %v383
    %v400 = vpack.c.b16 %v386, %v385
    %v401 = vpack.c.b16 %v388, %v387
    %v402 = vpack.c.b16 %v390, %v389
    %v403 = vpack.c.b16 %v392, %v391
    %v404 = vpack.c.b16 %v394, %v393
    %v405 = vpack.c.b16 %v396, %v395
    %v406 = vpack.c.b16 %v398, %v397
    %415 = vmatprep.subr.bf16.mxu0 0
    %416 = vmatpush1.bf16.msra.mxu0 %v406
    %417 = vmatprep.subr.bf16.mxu0 0
    %418 = vmatpush1.bf16.msra.mxu0 %v405
    %419 = vmatprep.subr.bf16.mxu0 0
    %420 = vmatpush1.bf16.msra.mxu0 %v404
    %421 = vmatprep.subr.bf16.mxu0 0
    %422 = vmatpush1.bf16.msra.mxu0 %v403
    %423 = vmatprep.subr.bf16.mxu0 0
    %424 = vmatpush1.bf16.msra.mxu0 %v402
    %425 = vmatprep.subr.bf16.mxu0 0
    %426 = vmatpush1.bf16.msra.mxu0 %v401
    %427 = vmatprep.subr.bf16.mxu0 0
    %428 = vmatpush1.bf16.msra.mxu0 %v400
    %429 = vmatprep.subr.bf16.mxu0 0
    %430 = vmatpush1.bf16.msra.mxu0 %v399
    %431 = vmatprep.subr.bf16.mxu0 0
    %432 = vmatpush2.bf16.msra.mxu0 0
    %433 = vmatprep.subr.bf16.mxu0 0
    %434 = vmatpush2.bf16.msra.mxu0 0
    %435 = vmatprep.subr.bf16.mxu0 0
    %436 = vmatpush2.bf16.msra.mxu0 0
    %437 = vmatprep.subr.bf16.mxu0 0
    %438 = vmatpush2.bf16.msra.mxu0 0
    %439 = vmatprep.subr.bf16.mxu0 0
    %440 = vmatpush2.bf16.msra.mxu0 0
    %441 = vmatprep.subr.bf16.mxu0 0
    %442 = vmatpush2.bf16.msra.mxu0 0
    %443 = vmatprep.subr.bf16.mxu0 0
    %444 = vmatpush2.bf16.msra.mxu0 0
    %445 = vmatprep.subr.bf16.mxu0 0
    %446 = vmatpush2.bf16.msra.mxu0 0
    %447 = vmatprep.mubr.bf16.mxu0 0
    %448 = vmatmul.mubr.bf16.gmra.mxu0 %v350
    %v449 = vpop.f32.mrf.mxu0
    %v450 = vadd.f32 0.0, %v449
    %v451 = vpop.f32.mrf.mxu0
    %v452 = vpop.f32.mrf.mxu0
    %v453 = vpop.f32.mrf.mxu0
    %454 = vdwg.mxu0
    %v455 = vadd.f32 %v192, %v450
    %v456 = vtanh.pop %v455
    %v457 = vsub.f32 %v72, %v456
    %v458 = vmul.f32 %v348, %v457
    %v459 = vadd.f32 %v456, %v458
    %460 = vst [vmem:[#allocation2] sm:$0xff] %v459
    %461 = vst [vmem:[#allocation9] sm:$0xff] %v459
    // Predicated region
    $region42: #{_gru_sequence_impl.1} parent=1 // pred_check
      _
    $region43: #{_gru_sequence_impl.1} parent=1 // pred_check_branch
      %463 = sbr.rel (0) target = $region45
    $region44: #{_gru_sequence_impl.1} parent=1 // pred_region
      %s465 = ssub.s32 128, 128
      %466 = vsyncadd [#allocation5], %s465
      %s468 = sshll.u32 [#allocation9], 4
      %s469 = int_to_ptr.vmem [resolvable:$true] %s468
      %471 = dma.vmem_to_hbm [thread:$0]  %s469, 128, %s6, [#allocation5]
    $region45: #{_gru_sequence_impl.1} parent=1 // pred_fallthru
      _
    // Predicated region
    $region46: #{_gru_sequence_impl.1} parent=1 // pred_check
      _
    $region47: #{_gru_sequence_impl.1} parent=1 // pred_check_branch
      %473 = sbr.rel (0) target = $region49
    $region48: #{_gru_sequence_impl.1} parent=1 // pred_region
      %474 = dma.done [#allocation5], 128
    $region49: #{_gru_sequence_impl.1} parent=1 // pred_fallthru
      _
    %475 = vsyncpa [#allocation4], 1
    %476 = vsyncpa [#allocation7], 1
    %477 = vsyncpa [#allocation5], 1

</llo_original>
